<compile_context>
chip_gen: v7x
topology: tpu7x:2x2x1
jax: 0.10.0
libtpu: 0.0.40
codegen_flags: <defaults>
</compile_context>

<pallas_src>
import functools

import jax
import jax.numpy as jnp
from jax import lax
from jax.experimental import pallas as pl
from jax.experimental.pallas import tpu as pltpu


def _round_up(x, m):
    return (x + m - 1) // m * m


# ------------------------ roll-direction probe (one-off) ---------------------


@functools.lru_cache(maxsize=None)
def _roll_rotates_forward():
    """True iff pltpu.roll(x, s, axis)[..., i] == x[..., (i - s) % N]
    (i.e. jnp.roll convention).  Tiny one-off probe kernel so the causal-shift
    direction is robust to the rotate convention of the installed Mosaic."""
    def probe(o_ref):
        o_ref[...] = pltpu.roll(
            lax.broadcasted_iota(jnp.int32, (8, 128), 1), 1, axis=1)

    try:
        out = pl.pallas_call(
            probe, out_shape=jax.ShapeDtypeStruct((8, 128), jnp.int32))()
        return int(jax.device_get(out)[0, 0]) == 127
    except Exception:  # conservative fallback: assume jnp.roll semantics
        return True


# ------------------------------ Pallas kernel -------------------------------


def _tcn_fused_kernel(x_ref, w_ref, b_ref, mask_ref, o_ref, *, meta, roll_fwd):
    """Fused TCN forward for one group of Bt batch elements.

    x_ref    : (1, C0_pad, Bt*L) f32 -- Bt batch elements side-by-side on lanes.
    w_ref    : (Rw, Wmax) bf16      -- all conv/downsample weights, row-packed.
    b_ref    : (Rb, 1) f32          -- all biases + fc weight column + fc bias.
    mask_ref : (Rm, Bt*L) f32       -- per-shift causal/segment masks (0/1).
    o_ref    : (1, 1, Bt) f32       -- one forecast per batch element.
    """
    k = meta["kernel_size"]
    L = meta["seg_len"]
    Bt = meta["batch_per_step"]
    LT = Bt * L

    def wslice(off, rows, cols):            # static slices on a Ref are free
        return w_ref[off:off + rows, 0:cols]

    def bias(off, rows):
        return b_ref[off:off + rows, 0:1]

    def causal_conv(inp, c_in_pad, rows_out, w_off, b_off, dilation, mask_rows):
        # Conv1d(C_in, C_out, k, dilation=d, padding=(k-1)*d) + chomp:
        #   out[:, t] = b + sum_j w[:, :, j] @ inp[:, t - (k-1-j)*d]  (zero pad)
        # Taps are built with an XLU lane roll + precomputed 0/1 mask (handles
        # both the causal zero pad and cross-batch bleed), stacked in registers
        # and fed to ONE MXU matmul per conv (no VMEM staging round-trip).
        taps = []
        for j in range(k):                  # static, tiny loop over taps
            shift = (k - 1 - j) * dilation
            if shift == 0:
                taps.append(inp)
            elif shift >= L:                # entirely outside the causal window
                taps.append(jnp.zeros_like(inp))
            else:
                amt = shift if roll_fwd else LT - shift
                rolled = pltpu.roll(inp, amt, axis=1)
                m = mask_ref[mask_rows[j]:mask_rows[j] + 1, :]   # (1, LT)
                taps.append(rolled * m)
        stacked = jnp.concatenate(taps, axis=0).astype(jnp.bfloat16)
        acc = jnp.dot(wslice(w_off, rows_out, k * c_in_pad), stacked,
                      preferred_element_type=jnp.float32)
        return acc + bias(b_off, rows_out)  # (rows_out, 1) broadcasts over LT

    h = x_ref[0]                            # (C0_pad, LT) f32; pad rows are 0
    for lm in meta["layers"]:
        ci, co, d = lm["c_in_pad"], lm["c_out_pad"], lm["dilation"]
        out = jnp.maximum(
            causal_conv(h, ci, co, lm["w1_off"], lm["b1_off"], d,
                        lm["mask_rows"]), 0.0)
        # TODO(synk): dropout is identity here (eval-mode forward); training
        # dropout would add a pltpu.prng_random_bits mask.
        out = jnp.maximum(
            causal_conv(out, co, co, lm["w2_off"], lm["b2_off"], d,
                        lm["mask_rows"]), 0.0)
        if lm["has_ds"]:
            res = jnp.dot(wslice(lm["wd_off"], co, ci), h.astype(jnp.bfloat16),
                          preferred_element_type=jnp.float32) + bias(lm["bd_off"], co)
        else:
            res = h
        h = out + res                       # TemporalBlock has no trailing ReLU

    # Epilogue: fused Linear(C_last, 1) on the last time step of every batch
    # segment.  The selection uses an exact f32 one-hot matmul (no host glue,
    # no extra bf16 rounding on the final values).
    c_last = meta["c_last_pad"]
    p_idx = lax.broadcasted_iota(jnp.int32, (LT, Bt), 0)
    s_idx = lax.broadcasted_iota(jnp.int32, (LT, Bt), 1)
    sel = (p_idx == s_idx * L + (L - 1)).astype(jnp.float32)        # (LT, Bt)
    y_last = jnp.dot(h, sel, preferred_element_type=jnp.float32)    # (c_last, Bt)
    val = jnp.sum(bias(meta["fc_w_off"], c_last) * y_last, axis=0, keepdims=True)
    o_ref[0] = (val + bias(meta["fc_b_off"], 1)).astype(o_ref.dtype)


# -------------------------- host-side packing / call -------------------------


def _flatten_conv_weight(w, c_in_pad, c_out_pad):
    """(C_out, C_in, k) -> (c_out_pad, k*c_in_pad) bf16, tap-major columns."""
    c_out, c_in, k = w.shape
    wt = jnp.transpose(w, (0, 2, 1))                          # (C_out, k, C_in)
    wt = jnp.pad(wt, ((0, c_out_pad - c_out), (0, 0), (0, c_in_pad - c_in)))
    return wt.reshape(c_out_pad, k * c_in_pad).astype(jnp.bfloat16)


def pack_tcn_params(params, fc_w, fc_b, num_inputs, kernel_size, L, Bt):
    """Pack every matmul weight into one bf16 buffer, every bias / fc param
    into one f32 buffer and all causal masks into one f32 buffer (one DMA
    each), plus the static slice offsets the kernel needs."""
    k = kernel_size
    LT = Bt * L
    w_blocks, b_blocks, mask_list = [], [], []
    w_off, b_off = 0, 0
    layers = []

    def add_w(block):                                        # (rows, cols) bf16
        nonlocal w_off
        off = w_off
        rows = _round_up(block.shape[0], 16)                 # bf16 sublane tile
        w_blocks.append(jnp.pad(block, ((0, rows - block.shape[0]), (0, 0))))
        w_off += rows
        return off

    def add_b(vec, rows):                                    # -> (rows, 1) f32
        nonlocal b_off
        off = b_off
        col = jnp.zeros((rows, 1), jnp.float32).at[:vec.size, 0].set(
            jnp.asarray(vec, jnp.float32).reshape(-1))
        rows_pad = _round_up(rows, 8)                        # f32 sublane tile
        b_blocks.append(jnp.pad(col, ((0, rows_pad - rows), (0, 0))))
        b_off += rows_pad
        return off

    t_in_seg = jnp.arange(LT, dtype=jnp.int32) % L           # host-side only

    def add_mask(shift):
        mask_list.append((t_in_seg >= shift).astype(jnp.float32))
        return len(mask_list) - 1

    rows_in = _round_up(num_inputs, 8)
    for p in params:
        c_out = p["w1"].shape[0]
        rows_out = _round_up(c_out, 8)
        d = p["dilation"]
        lm = dict(
            c_in_pad=rows_in, c_out_pad=rows_out, dilation=d, has_ds=p["has_ds"],
            w1_off=add_w(_flatten_conv_weight(p["w1"], rows_in, rows_out)),
            b1_off=add_b(p["b1"], rows_out),
            w2_off=add_w(_flatten_conv_weight(p["w2"], rows_out, rows_out)),
            b2_off=add_b(p["b2"], rows_out),
            mask_rows=tuple(
                add_mask((k - 1 - j) * d) if 0 < (k - 1 - j) * d < L else -1
                for j in range(k)))
        if p["has_ds"]:
            wd = jnp.pad(p["wd"][:, :, 0].astype(jnp.bfloat16),
                         ((0, rows_out - c_out),
                          (0, rows_in - p["wd"].shape[1])))
            lm["wd_off"] = add_w(wd)
            lm["bd_off"] = add_b(p["bd"], rows_out)
        layers.append(lm)
        rows_in = rows_out

    fc_w_off = add_b(fc_w, rows_in)            # (1, C_last) -> (c_last_pad, 1)
    fc_b_off = add_b(fc_b, 1)

    w_max = max(b.shape[1] for b in w_blocks)
    w_all = jnp.concatenate(
        [jnp.pad(b, ((0, 0), (0, w_max - b.shape[1]))) for b in w_blocks], axis=0)
    b_all = jnp.concatenate(b_blocks, axis=0)
    n_mask = _round_up(max(len(mask_list), 1), 8)
    mask_all = jnp.zeros((n_mask, LT), jnp.float32)
    if mask_list:
        mask_all = mask_all.at[:len(mask_list)].set(jnp.stack(mask_list))

    meta = dict(kernel_size=k, seg_len=L, batch_per_step=Bt,
                layers=tuple(layers), c_last_pad=rows_in,
                fc_w_off=fc_w_off, fc_b_off=fc_b_off)
    return w_all, b_all, mask_all, meta


def tcn_forward(x, params, fc_w, fc_b, *, kernel_size, group_steps=2):
    """x: (B, L, num_inputs) -> (B, 1); mirrors TCN.forward (transpose, blocks, fc)."""
    B, L, c_in0 = x.shape
    # Batch fusion: pack Bt batch elements side-by-side along the lane/time axis
    # so the whole network runs in very few grid steps (per-step pipeline
    # overhead dominates at this size).  Keep 2 steps so both v7x TensorCores
    # get work; on v5e/v6e a single fused step would also be fine.
    G = group_steps if (group_steps > 0 and B % group_steps == 0) else 1
    Bt = B // G
    LT = Bt * L
    rows0 = _round_up(c_in0, 8)

    h = jnp.transpose(x, (0, 2, 1))                          # (B, C, L)
    h = jnp.pad(h, ((0, 0), (0, rows0 - c_in0), (0, 0)))     # channels -> x8 rows
    # (B,C,L) -> (G,Bt,C,L) -> (G,C,Bt,L) -> (G,C,Bt*L)
    h = h.reshape(G, Bt, rows0, L).transpose(0, 2, 1, 3).reshape(G, rows0, LT)

    w_all, b_all, mask_all, meta = pack_tcn_params(
        params, fc_w, fc_b, c_in0, kernel_size, L, Bt)

    kern = functools.partial(_tcn_fused_kernel, meta=meta,
                             roll_fwd=_roll_rotates_forward())
    out = pl.pallas_call(
        kern,
        out_shape=jax.ShapeDtypeStruct((G, 1, Bt), jnp.float32),
        grid=(G,),
        in_specs=[
            pl.BlockSpec((1, rows0, LT), lambda g: (g, 0, 0)),
            pl.BlockSpec(w_all.shape, lambda g: (0, 0)),     # same block every
            pl.BlockSpec(b_all.shape, lambda g: (0, 0)),     # step -> fetched
            pl.BlockSpec(mask_all.shape, lambda g: (0, 0)),  # only once
        ],
        out_specs=pl.BlockSpec((1, 1, Bt), lambda g: (g, 0, 0)),
        compiler_params=pltpu.CompilerParams(
            dimension_semantics=("parallel",),               # v7x: 1 step per TC
            vmem_limit_bytes=32 * 1024 * 1024),
    )(h, w_all, b_all, mask_all)
    return out.reshape(B, 1)


# ------------------------------- parameters ---------------------------------


def make_tcn_params(key, num_inputs, num_channels, kernel_size):
    """Deterministic synthetic parameters (conv weights ~ N(0, 0.01), like init_weights)."""
    params, in_c = [], num_inputs
    for i, out_c in enumerate(num_channels):
        key, k1, k2, k3, k4, k5, k6 = jax.random.split(key, 7)
        has_ds = in_c != out_c
        p = dict(
            w1=0.01 * jax.random.normal(k1, (out_c, in_c, kernel_size), jnp.float32),
            b1=0.01 * jax.random.normal(k2, (out_c, 1), jnp.float32),
            w2=0.01 * jax.random.normal(k3, (out_c, out_c, kernel_size), jnp.float32),
            b2=0.01 * jax.random.normal(k4, (out_c, 1), jnp.float32),
            has_ds=has_ds, dilation=2 ** i,
        )
        if has_ds:
            p["wd"] = 0.01 * jax.random.normal(k5, (out_c, in_c, 1), jnp.float32)
            p["bd"] = 0.01 * jax.random.normal(k6, (out_c, 1), jnp.float32)
        params.append(p)
        in_c = out_c
    key, kf1, kf2 = jax.random.split(key, 3)
    fc_w = jax.random.normal(kf1, (1, num_channels[-1]), jnp.float32) / jnp.sqrt(
        float(num_channels[-1]))
    fc_b = 0.01 * jax.random.normal(kf2, (1, 1), jnp.float32)
    return params, fc_w, fc_b


# ---------------------------- pure-JAX reference -----------------------------


def _ref_causal_conv(x, w, b, dilation, padding):
    B, C_in, L = x.shape
    xp = jnp.pad(x, ((0, 0), (0, 0), (padding, 0)))
    acc = jnp.zeros((B, w.shape[0], L), jnp.float32)
    for j in range(w.shape[2]):
        tap = xp[:, :, j * dilation: j * dilation + L]
        acc = acc + jnp.einsum("oc,bcl->bol", w[:, :, j], tap)
    return acc + b[None, :, :]


def tcn_reference(x, params, fc_w, fc_b, *, kernel_size):
    h = jnp.transpose(x, (0, 2, 1))
    for p in params:
        padding = (kernel_size - 1) * p["dilation"]
        out = _ref_causal_conv(h, p["w1"], p["b1"], p["dilation"], padding)
        out = jnp.maximum(out, 0.0)
        out = _ref_causal_conv(out, p["w2"], p["b2"], p["dilation"], padding)
        out = jnp.maximum(out, 0.0)
        if p["has_ds"]:
            res = jnp.einsum("oc,bcl->bol", p["wd"][:, :, 0], h) + p["bd"][None, :, :]
        else:
            res = h
        h = out + res
    y_last = h[:, :, -1]
    return y_last @ fc_w.T + fc_b[0]


# ---------------------------------- main -------------------------------------


if __name__ == "__main__":
    key = jax.random.PRNGKey(0)
    B, L, num_inputs = 4, 128, 4        # L multiple of 128 -> lane-aligned segments
    num_channels = [16, 16]             # layer 0 has a 1x1 downsample, layer 1 does not
    kernel_size = 3

    k_x, k_p = jax.random.split(key)
    x = jax.random.normal(k_x, (B, L, num_inputs), jnp.float32)
    params, fc_w, fc_b = make_tcn_params(k_p, num_inputs, num_channels, kernel_size)

    out = tcn_forward(x, params, fc_w, fc_b, kernel_size=kernel_size)
    out = jax.block_until_ready(out)
    assert out.shape == (B, 1)

    ref = jax.block_until_ready(
        tcn_reference(x, params, fc_w, fc_b, kernel_size=kernel_size))
    # bf16 MXU operands vs. f32 reference -> relaxed tolerance.
    assert jnp.allclose(out, ref, atol=1e-2, rtol=1e-2), (out, ref)

    print("KERNEL_OK")
</pallas_src>

<mosaic_0001>
module attributes {stable_mosaic.version = 11 : i64} {
  func.func @_tcn_fused_kernel(%arg0: i32, %arg1: memref<1x8x256xf32, #tpu.memory_space<vmem>>, %arg2: memref<80x48xbf16, #tpu.memory_space<vmem>>, %arg3: memref<104x1xf32, #tpu.memory_space<vmem>>, %arg4: memref<8x256xf32, #tpu.memory_space<vmem>>, %arg5: memref<1x1x2xf32, #tpu.memory_space<vmem>>) attributes {dimension_semantics = [#tpu.dimension_semantics<parallel>], iteration_bounds = array<i64: 2>, scalar_prefetch = 0 : i64, scratch_operands = 0 : i64, tpu.core_type = #tpu.core_type<tc>, window_params = [{transform_indices = @transform_0, window_bounds = array<i64: 1, 8, 256>}, {pipeline_mode = #tpu.pipeline_mode<synchronous>, transform_indices = @transform_1, window_bounds = array<i64: 80, 48>}, {pipeline_mode = #tpu.pipeline_mode<synchronous>, transform_indices = @transform_2, window_bounds = array<i64: 104, 1>}, {pipeline_mode = #tpu.pipeline_mode<synchronous>, transform_indices = @transform_3, window_bounds = array<i64: 8, 256>}, {transform_indices = @transform_4, window_bounds = array<i64: 1, 1, 2>}]} {
    %c0 = arith.constant 0 : index
    %c0_0 = arith.constant 0 : index
    %c0_1 = arith.constant 0 : index
    %0 = vector.load %arg1[%c0, %c0_0, %c0_1] : memref<1x8x256xf32, #tpu.memory_space<vmem>>, vector<1x8x256xf32>
    %1 = vector.shape_cast %0 : vector<1x8x256xf32> to vector<8x256xf32>
    %c2_i32 = arith.constant 2 : i32
    %2 = tpu.dynamic_rotate %1 by %c2_i32 dim 1 : vector<8x256xf32>, i32 -> vector<8x256xf32>
    %c0_2 = arith.constant 0 : index
    %c0_3 = arith.constant 0 : index
    %3 = vector.load %arg4[%c0_2, %c0_3] : memref<8x256xf32, #tpu.memory_space<vmem>>, vector<1x256xf32>
    %4 = vector.broadcast %3 : vector<1x256xf32> to vector<8x256xf32>
    %5 = arith.mulf %2, %4 : vector<8x256xf32>
    %c1_i32 = arith.constant 1 : i32
    %6 = tpu.dynamic_rotate %1 by %c1_i32 dim 1 : vector<8x256xf32>, i32 -> vector<8x256xf32>
    %c1 = arith.constant 1 : index
    %c0_4 = arith.constant 0 : index
    %7 = vector.load %arg4[%c1, %c0_4] : memref<8x256xf32, #tpu.memory_space<vmem>>, vector<1x256xf32>
    %8 = vector.broadcast %7 : vector<1x256xf32> to vector<8x256xf32>
    %9 = arith.mulf %6, %8 : vector<8x256xf32>
    %10 = tpu.concatenate %5, %9, %1 in 0 : vector<8x256xf32>, vector<8x256xf32>, vector<8x256xf32> -> vector<24x256xf32>
    %11 = arith.truncf %10 : vector<24x256xf32> to vector<24x256xbf16>
    %c0_5 = arith.constant 0 : index
    %c0_6 = arith.constant 0 : index
    %12 = vector.load %arg2[%c0_5, %c0_6] : memref<80x48xbf16, #tpu.memory_space<vmem>>, vector<16x24xbf16>
    %cst = arith.constant dense<0.000000e+00> : vector<16x256xf32>
    %13 = tpu.matmul %12, %11, %cst {dimension_numbers = #tpu.dot_dimension_numbers<[1], [0], [0], [1], [0, 0, 1, 1], [], []>} : vector<16x24xbf16>, vector<24x256xbf16>, vector<16x256xf32> -> vector<16x256xf32>
    %c0_7 = arith.constant 0 : index
    %c0_8 = arith.constant 0 : index
    %14 = vector.load %arg3[%c0_7, %c0_8] : memref<104x1xf32, #tpu.memory_space<vmem>>, vector<16x1xf32>
    %15 = vector.broadcast %14 : vector<16x1xf32> to vector<16x256xf32>
    %16 = arith.addf %13, %15 : vector<16x256xf32>
    %cst_9 = arith.constant 0.000000e+00 : f32
    %17 = vector.broadcast %cst_9 : f32 to vector<16x256xf32>
    %18 = arith.maximumf %16, %17 : vector<16x256xf32>
    %c2_i32_10 = arith.constant 2 : i32
    %19 = tpu.dynamic_rotate %18 by %c2_i32_10 dim 1 : vector<16x256xf32>, i32 -> vector<16x256xf32>
    %c0_11 = arith.constant 0 : index
    %c0_12 = arith.constant 0 : index
    %20 = vector.load %arg4[%c0_11, %c0_12] : memref<8x256xf32, #tpu.memory_space<vmem>>, vector<1x256xf32>
    %21 = vector.broadcast %20 : vector<1x256xf32> to vector<16x256xf32>
    %22 = arith.mulf %19, %21 : vector<16x256xf32>
    %c1_i32_13 = arith.constant 1 : i32
    %23 = tpu.dynamic_rotate %18 by %c1_i32_13 dim 1 : vector<16x256xf32>, i32 -> vector<16x256xf32>
    %c1_14 = arith.constant 1 : index
    %c0_15 = arith.constant 0 : index
    %24 = vector.load %arg4[%c1_14, %c0_15] : memref<8x256xf32, #tpu.memory_space<vmem>>, vector<1x256xf32>
    %25 = vector.broadcast %24 : vector<1x256xf32> to vector<16x256xf32>
    %26 = arith.mulf %23, %25 : vector<16x256xf32>
    %27 = tpu.concatenate %22, %26, %18 in 0 : vector<16x256xf32>, vector<16x256xf32>, vector<16x256xf32> -> vector<48x256xf32>
    %28 = arith.truncf %27 : vector<48x256xf32> to vector<48x256xbf16>
    %c16 = arith.constant 16 : index
    %c0_16 = arith.constant 0 : index
    %29 = vector.load %arg2[%c16, %c0_16] : memref<80x48xbf16, #tpu.memory_space<vmem>>, vector<16x48xbf16>
    %cst_17 = arith.constant dense<0.000000e+00> : vector<16x256xf32>
    %30 = tpu.matmul %29, %28, %cst_17 {dimension_numbers = #tpu.dot_dimension_numbers<[1], [0], [0], [1], [0, 0, 1, 1], [], []>} : vector<16x48xbf16>, vector<48x256xbf16>, vector<16x256xf32> -> vector<16x256xf32>
    %c16_18 = arith.constant 16 : index
    %c0_19 = arith.constant 0 : index
    %31 = vector.load %arg3[%c16_18, %c0_19] : memref<104x1xf32, #tpu.memory_space<vmem>>, vector<16x1xf32>
    %32 = vector.broadcast %31 : vector<16x1xf32> to vector<16x256xf32>
    %33 = arith.addf %30, %32 : vector<16x256xf32>
    %cst_20 = arith.constant 0.000000e+00 : f32
    %34 = vector.broadcast %cst_20 : f32 to vector<16x256xf32>
    %35 = arith.maximumf %33, %34 : vector<16x256xf32>
    %c32 = arith.constant 32 : index
    %c0_21 = arith.constant 0 : index
    %36 = vector.load %arg2[%c32, %c0_21] : memref<80x48xbf16, #tpu.memory_space<vmem>>, vector<16x8xbf16>
    %37 = arith.truncf %1 : vector<8x256xf32> to vector<8x256xbf16>
    %cst_22 = arith.constant dense<0.000000e+00> : vector<16x256xf32>
    %38 = tpu.matmul %36, %37, %cst_22 {dimension_numbers = #tpu.dot_dimension_numbers<[1], [0], [0], [1], [0, 0, 1, 1], [], []>} : vector<16x8xbf16>, vector<8x256xbf16>, vector<16x256xf32> -> vector<16x256xf32>
    %c32_23 = arith.constant 32 : index
    %c0_24 = arith.constant 0 : index
    %39 = vector.load %arg3[%c32_23, %c0_24] : memref<104x1xf32, #tpu.memory_space<vmem>>, vector<16x1xf32>
    %40 = vector.broadcast %39 : vector<16x1xf32> to vector<16x256xf32>
    %41 = arith.addf %38, %40 : vector<16x256xf32>
    %42 = arith.addf %35, %41 : vector<16x256xf32>
    %c4_i32 = arith.constant 4 : i32
    %43 = tpu.dynamic_rotate %42 by %c4_i32 dim 1 : vector<16x256xf32>, i32 -> vector<16x256xf32>
    %c2 = arith.constant 2 : index
    %c0_25 = arith.constant 0 : index
    %44 = vector.load %arg4[%c2, %c0_25] : memref<8x256xf32, #tpu.memory_space<vmem>>, vector<1x256xf32>
    %45 = vector.broadcast %44 : vector<1x256xf32> to vector<16x256xf32>
    %46 = arith.mulf %43, %45 : vector<16x256xf32>
    %c2_i32_26 = arith.constant 2 : i32
    %47 = tpu.dynamic_rotate %42 by %c2_i32_26 dim 1 : vector<16x256xf32>, i32 -> vector<16x256xf32>
    %c3 = arith.constant 3 : index
    %c0_27 = arith.constant 0 : index
    %48 = vector.load %arg4[%c3, %c0_27] : memref<8x256xf32, #tpu.memory_space<vmem>>, vector<1x256xf32>
    %49 = vector.broadcast %48 : vector<1x256xf32> to vector<16x256xf32>
    %50 = arith.mulf %47, %49 : vector<16x256xf32>
    %51 = tpu.concatenate %46, %50, %42 in 0 : vector<16x256xf32>, vector<16x256xf32>, vector<16x256xf32> -> vector<48x256xf32>
    %52 = arith.truncf %51 : vector<48x256xf32> to vector<48x256xbf16>
    %c48 = arith.constant 48 : index
    %c0_28 = arith.constant 0 : index
    %53 = vector.load %arg2[%c48, %c0_28] : memref<80x48xbf16, #tpu.memory_space<vmem>>, vector<16x48xbf16>
    %cst_29 = arith.constant dense<0.000000e+00> : vector<16x256xf32>
    %54 = tpu.matmul %53, %52, %cst_29 {dimension_numbers = #tpu.dot_dimension_numbers<[1], [0], [0], [1], [0, 0, 1, 1], [], []>} : vector<16x48xbf16>, vector<48x256xbf16>, vector<16x256xf32> -> vector<16x256xf32>
    %c48_30 = arith.constant 48 : index
    %c0_31 = arith.constant 0 : index
    %55 = vector.load %arg3[%c48_30, %c0_31] : memref<104x1xf32, #tpu.memory_space<vmem>>, vector<16x1xf32>
    %56 = vector.broadcast %55 : vector<16x1xf32> to vector<16x256xf32>
    %57 = arith.addf %54, %56 : vector<16x256xf32>
    %cst_32 = arith.constant 0.000000e+00 : f32
    %58 = vector.broadcast %cst_32 : f32 to vector<16x256xf32>
    %59 = arith.maximumf %57, %58 : vector<16x256xf32>
    %c4_i32_33 = arith.constant 4 : i32
    %60 = tpu.dynamic_rotate %59 by %c4_i32_33 dim 1 : vector<16x256xf32>, i32 -> vector<16x256xf32>
    %c2_34 = arith.constant 2 : index
    %c0_35 = arith.constant 0 : index
    %61 = vector.load %arg4[%c2_34, %c0_35] : memref<8x256xf32, #tpu.memory_space<vmem>>, vector<1x256xf32>
    %62 = vector.broadcast %61 : vector<1x256xf32> to vector<16x256xf32>
    %63 = arith.mulf %60, %62 : vector<16x256xf32>
    %c2_i32_36 = arith.constant 2 : i32
    %64 = tpu.dynamic_rotate %59 by %c2_i32_36 dim 1 : vector<16x256xf32>, i32 -> vector<16x256xf32>
    %c3_37 = arith.constant 3 : index
    %c0_38 = arith.constant 0 : index
    %65 = vector.load %arg4[%c3_37, %c0_38] : memref<8x256xf32, #tpu.memory_space<vmem>>, vector<1x256xf32>
    %66 = vector.broadcast %65 : vector<1x256xf32> to vector<16x256xf32>
    %67 = arith.mulf %64, %66 : vector<16x256xf32>
    %68 = tpu.concatenate %63, %67, %59 in 0 : vector<16x256xf32>, vector<16x256xf32>, vector<16x256xf32> -> vector<48x256xf32>
    %69 = arith.truncf %68 : vector<48x256xf32> to vector<48x256xbf16>
    %c64 = arith.constant 64 : index
    %c0_39 = arith.constant 0 : index
    %70 = vector.load %arg2[%c64, %c0_39] : memref<80x48xbf16, #tpu.memory_space<vmem>>, vector<16x48xbf16>
    %cst_40 = arith.constant dense<0.000000e+00> : vector<16x256xf32>
    %71 = tpu.matmul %70, %69, %cst_40 {dimension_numbers = #tpu.dot_dimension_numbers<[1], [0], [0], [1], [0, 0, 1, 1], [], []>} : vector<16x48xbf16>, vector<48x256xbf16>, vector<16x256xf32> -> vector<16x256xf32>
    %c64_41 = arith.constant 64 : index
    %c0_42 = arith.constant 0 : index
    %72 = vector.load %arg3[%c64_41, %c0_42] : memref<104x1xf32, #tpu.memory_space<vmem>>, vector<16x1xf32>
    %73 = vector.broadcast %72 : vector<16x1xf32> to vector<16x256xf32>
    %74 = arith.addf %71, %73 : vector<16x256xf32>
    %cst_43 = arith.constant 0.000000e+00 : f32
    %75 = vector.broadcast %cst_43 : f32 to vector<16x256xf32>
    %76 = arith.maximumf %74, %75 : vector<16x256xf32>
    %77 = arith.addf %76, %42 : vector<16x256xf32>
    %78 = tpu.iota {dimensions = array<i32: 0>} : vector<256x2xi32>
    %79 = tpu.iota {dimensions = array<i32: 1>} : vector<256x2xi32>
    %c128_i32 = arith.constant 128 : i32
    %80 = vector.broadcast %c128_i32 : i32 to vector<256x2xi32>
    %81 = arith.muli %79, %80 : vector<256x2xi32>
    %c127_i32 = arith.constant 127 : i32
    %82 = vector.broadcast %c127_i32 : i32 to vector<256x2xi32>
    %83 = arith.addi %81, %82 : vector<256x2xi32>
    %84 = arith.cmpi eq, %78, %83 : vector<256x2xi32>
    %85 = arith.extui %84 : vector<256x2xi1> to vector<256x2xi32>
    %86 = arith.sitofp %85 : vector<256x2xi32> to vector<256x2xf32>
    %cst_44 = arith.constant dense<0.000000e+00> : vector<16x2xf32>
    %87 = tpu.matmul %77, %86, %cst_44 {dimension_numbers = #tpu.dot_dimension_numbers<[1], [0], [0], [1], [0, 0, 1, 1], [], []>} : vector<16x256xf32>, vector<256x2xf32>, vector<16x2xf32> -> vector<16x2xf32>
    %c80 = arith.constant 80 : index
    %c0_45 = arith.constant 0 : index
    %88 = vector.load %arg3[%c80, %c0_45] : memref<104x1xf32, #tpu.memory_space<vmem>>, vector<16x1xf32>
    %89 = vector.broadcast %88 : vector<16x1xf32> to vector<16x2xf32>
    %90 = arith.mulf %89, %87 : vector<16x2xf32>
    %cst_46 = arith.constant dense<0.000000e+00> : vector<2xf32>
    %91 = vector.multi_reduction <add>, %90, %cst_46 [0] : vector<16x2xf32> to vector<2xf32>
    %92 = vector.shape_cast %91 : vector<2xf32> to vector<1x2xf32>
    %c96 = arith.constant 96 : index
    %c0_47 = arith.constant 0 : index
    %93 = vector.load %arg3[%c96, %c0_47] : memref<104x1xf32, #tpu.memory_space<vmem>>, vector<1x1xf32>
    %94 = vector.broadcast %93 : vector<1x1xf32> to vector<1x2xf32>
    %95 = arith.addf %92, %94 : vector<1x2xf32>
    %c0_48 = arith.constant 0 : index
    %c0_49 = arith.constant 0 : index
    %c0_50 = arith.constant 0 : index
    %96 = vector.load %arg5[%c0_48, %c0_49, %c0_50] : memref<1x1x2xf32, #tpu.memory_space<vmem>>, vector<1x1x2xf32>
    %97 = vector.shape_cast %96 : vector<1x1x2xf32> to vector<1x2xf32>
    %98 = vector.shape_cast %95 : vector<1x2xf32> to vector<1x1x2xf32>
    tpu.vector_store %arg5[%c0_48, %c0_49, %c0_50], %98 {strides = array<i32>} : memref<1x1x2xf32, #tpu.memory_space<vmem>>, vector<1x1x2xf32>,
    return
  }
  func.func @transform_0(%arg0: i32) -> (i32, i32, i32) {
    %c0_i32 = arith.constant 0 : i32
    %c0_i32_0 = arith.constant 0 : i32
    %c0_i32_1 = arith.constant 0 : i32
    return %arg0, %c0_i32, %c0_i32_0 : i32, i32, i32
  }
  func.func @transform_1(%arg0: i32) -> (i32, i32) {
    %c0_i32 = arith.constant 0 : i32
    %c0_i32_0 = arith.constant 0 : i32
    %c0_i32_1 = arith.constant 0 : i32
    return %c0_i32, %c0_i32_0 : i32, i32
  }
  func.func @transform_2(%arg0: i32) -> (i32, i32) {
    %c0_i32 = arith.constant 0 : i32
    %c0_i32_0 = arith.constant 0 : i32
    %c0_i32_1 = arith.constant 0 : i32
    return %c0_i32, %c0_i32_0 : i32, i32
  }
  func.func @transform_3(%arg0: i32) -> (i32, i32) {
    %c0_i32 = arith.constant 0 : i32
    %c0_i32_0 = arith.constant 0 : i32
    %c0_i32_1 = arith.constant 0 : i32
    return %c0_i32, %c0_i32_0 : i32, i32
  }
  func.func @transform_4(%arg0: i32) -> (i32, i32, i32) {
    %c0_i32 = arith.constant 0 : i32
    %c0_i32_0 = arith.constant 0 : i32
    %c0_i32_1 = arith.constant 0 : i32
    return %arg0, %c0_i32, %c0_i32_0 : i32, i32, i32
  }
}

</mosaic_0001>

<llo_original>
// kernel: tpu_custom_call.1
$region0: #{tpu_custom_call.1}
  #allocation0 [shape = 'u32[]', space=smem, size = 0x4, offset = 0x4, fixed_abs, tag = 'smem constant byte address 0x4 - core index']
  #allocation1 [shape = 'u32[144,128]{1,0:T(1,128)}', space=vmem, size = 0x12000, scoped, tag = 'internal scratch']
  %s0 = inlined_call_operand.vmem [shape: f32[2,8,256], index: 0, kind: input, shape index: {}]
  %s1 = inlined_call_operand.vmem [shape: bf16[80,48], index: 1, kind: input, shape index: {}]
  %s2 = inlined_call_operand.vmem [shape: f32[104,1], index: 2, kind: input, shape index: {}]
  %s3 = inlined_call_operand.vmem [shape: f32[8,256], index: 3, kind: input, shape index: {}]
  %s4 = inlined_call_operand.hbm [shape: f32[2,1,2], index: 4, kind: output, shape index: {}]
  %s5 = sld [smem:[#allocation0]]
  $region49: #{tpu_custom_call.1} parent=0
    _
  %s7 = ssub.s32 1, %s5
  %s8 = scalar_select 0, %s7, %s5
  $region1: #{tpu_custom_call.1} parent=0
    #allocation2 [shape = 'u8[1024]{0}', space=vmem, size = 0x400, scoped, tag = 'output window, operand 0']
    #allocation3 [shape = 's32[2]{0}', space=sflag, size = 0x8, scoped, tag = 'scoped memory for tpu_custom_call.1']
    %9 = vsyncpa [#allocation3], 0
    %s10 = scalar_lea.sflag [#allocation3], 1
    %11 = vsyncpa %s10, 0
    loop: start=0, step=1, limit=4
    $region2: #{tpu_custom_call.1} parent=1 // loop_pre_header
      _
    $region3: #{tpu_custom_call.1} parent=1 // loop_header
      %s13 = sphi 0, %s17
      %p14 = scmp.ge.s32.totalorder %s13, 4
      %s23 = sphi 0, %s25
      %s26 = sphi 0, %s23
      %s27 = sphi 0, %s26
      %s43 = sphi 0, %s27
      %s47 = sphi 0, %s47
      %s49 = sphi 0, %s47
      %s50 = sphi 0, %s49
      %s64 = sphi 0, %s50
      %s68 = sphi 0, %s68
      %s70 = sphi 0, %s68
      %s71 = sphi 0, %s70
      %s85 = sphi 0, %s71
      %s89 = sphi 0, %s89
      %s91 = sphi 0, %s89
      %s92 = sphi 0, %s91
      %s106 = sphi 0, %s92
      %s112 = sphi 0, %s114
      %s115 = sphi 0, %s112
      %s116 = sphi 0, %s115
      %s132 = sphi 0, %s116
    $region4: #{tpu_custom_call.1} parent=1 // loop_header_branch
      %16 = sbr.rel (%p14) target = $region8
    $region5: #{tpu_custom_call.1} parent=1 // loop_body
      %s18 = ssub.s32 %s13, 1
      %s19 = ssub.s32 %s13, 2
      %s20 = sadd.s32 %s13, 1
      %s21 = ssub.s32 %s13, %s20
      %p22 = scmp.eq.s32.totalorder %s21, 0
      %s24 = sadd.s32 %s23, 1
      %s25 = scalar_select %p22, %s23, %s24
      %p28 = pneg %p22
      %p29 = scmp.eq.s32.totalorder %s13, 1
      %p30 = por %p28, %p29
      %p31 = scmp.ne.s32.totalorder %s23, %s26
      %p32 = scmp.eq.s32.totalorder %s13, 0
      %p33 = por %p31, %p32
      %p34 = scmp.ne.s32.totalorder %s23, %s26
      %p35 = scmp.eq.s32.totalorder %s18, 1
      %p36 = por %p34, %p35
      %p37 = scmp.ne.s32.totalorder %s26, %s27
      %p38 = scmp.eq.s32.totalorder %s18, 0
      %p39 = por %p37, %p38
      %p40 = scmp.ne.s32.totalorder %s26, %s27
      %p41 = scmp.eq.s32.totalorder %s19, 1
      %p42 = por %p40, %p41
      %p44 = scmp.ne.s32.totalorder %s27, %s43
      %p45 = scmp.eq.s32.totalorder %s19, 0
      %p46 = por %p44, %p45
      %s48 = sadd.s32 %s47, 1
      %p51 = scmp.eq.s32.totalorder %s13, 1
      %p52 = scmp.ne.s32.totalorder %s47, %s49
      %p53 = scmp.eq.s32.totalorder %s13, 0
      %p54 = por %p52, %p53
      %p55 = scmp.ne.s32.totalorder %s47, %s49
      %p56 = scmp.eq.s32.totalorder %s18, 1
      %p57 = por %p55, %p56
      %p58 = scmp.ne.s32.totalorder %s49, %s50
      %p59 = scmp.eq.s32.totalorder %s18, 0
      %p60 = por %p58, %p59
      %p61 = scmp.ne.s32.totalorder %s49, %s50
      %p62 = scmp.eq.s32.totalorder %s19, 1
      %p63 = por %p61, %p62
      %p65 = scmp.ne.s32.totalorder %s50, %s64
      %p66 = scmp.eq.s32.totalorder %s19, 0
      %p67 = por %p65, %p66
      %s69 = sadd.s32 %s68, 1
      %p72 = scmp.eq.s32.totalorder %s13, 1
      %p73 = scmp.ne.s32.totalorder %s68, %s70
      %p74 = scmp.eq.s32.totalorder %s13, 0
      %p75 = por %p73, %p74
      %p76 = scmp.ne.s32.totalorder %s68, %s70
      %p77 = scmp.eq.s32.totalorder %s18, 1
      %p78 = por %p76, %p77
      %p79 = scmp.ne.s32.totalorder %s70, %s71
      %p80 = scmp.eq.s32.totalorder %s18, 0
      %p81 = por %p79, %p80
      %p82 = scmp.ne.s32.totalorder %s70, %s71
      %p83 = scmp.eq.s32.totalorder %s19, 1
      %p84 = por %p82, %p83
      %p86 = scmp.ne.s32.totalorder %s71, %s85
      %p87 = scmp.eq.s32.totalorder %s19, 0
      %p88 = por %p86, %p87
      %s90 = sadd.s32 %s89, 1
      %p93 = scmp.eq.s32.totalorder %s13, 1
      %p94 = scmp.ne.s32.totalorder %s89, %s91
      %p95 = scmp.eq.s32.totalorder %s13, 0
      %p96 = por %p94, %p95
      %p97 = scmp.ne.s32.totalorder %s89, %s91
      %p98 = scmp.eq.s32.totalorder %s18, 1
      %p99 = por %p97, %p98
      %p100 = scmp.ne.s32.totalorder %s91, %s92
      %p101 = scmp.eq.s32.totalorder %s18, 0
      %p102 = por %p100, %p101
      %p103 = scmp.ne.s32.totalorder %s91, %s92
      %p104 = scmp.eq.s32.totalorder %s19, 1
      %p105 = por %p103, %p104
      %p107 = scmp.ne.s32.totalorder %s92, %s106
      %p108 = scmp.eq.s32.totalorder %s19, 0
      %p109 = por %p107, %p108
      %s110 = ssub.s32 %s13, %s20
      %p111 = scmp.eq.s32.totalorder %s110, 0
      %s113 = sadd.s32 %s112, 1
      %s114 = scalar_select %p111, %s112, %s113
      %p117 = pneg %p111
      %p118 = scmp.eq.s32.totalorder %s13, 1
      %p119 = por %p117, %p118
      %p120 = scmp.ne.s32.totalorder %s112, %s115
      %p121 = scmp.eq.s32.totalorder %s13, 0
      %p122 = por %p120, %p121
      %p123 = scmp.ne.s32.totalorder %s112, %s115
      %p124 = scmp.eq.s32.totalorder %s18, 1
      %p125 = por %p123, %p124
      %p126 = scmp.ne.s32.totalorder %s115, %s116
      %p127 = scmp.eq.s32.totalorder %s18, 0
      %p128 = por %p126, %p127
      %p129 = scmp.ne.s32.totalorder %s115, %s116
      %p130 = scmp.eq.s32.totalorder %s19, 1
      %p131 = por %p129, %p130
      %p133 = scmp.ne.s32.totalorder %s116, %s132
      %p134 = scmp.eq.s32.totalorder %s19, 0
      %p135 = por %p133, %p134
      %p136 = scmp.le.s32.totalorder 1, %s13
      %p137 = scmp.lt.s32.totalorder %s13, 3
      %p138 = pnand %p136, %p137
      %p139 = pneg %p138
      // Predicated region
      $region9: #{tpu_custom_call.1} parent=5 // pred_check
        _
      $region10: #{tpu_custom_call.1} parent=5 // pred_check_branch
        %141 = sbr.rel (%p138) target = $region12
      $region11: #{tpu_custom_call.1} parent=5 // pred_region
        %s142 = ssub.s32 %s13, 1
        // Predicated region
        $region13: #{tpu_custom_call.1} parent=11 // pred_check
          %p143 = pneg %p60
        $region14: #{tpu_custom_call.1} parent=11 // pred_check_branch
          %145 = sbr.rel (%p143) target = $region16
        $region15: #{tpu_custom_call.1} parent=11 // pred_region
          _
        $region16: #{tpu_custom_call.1} parent=11 // pred_fallthru
          _
        // Predicated region
        $region17: #{tpu_custom_call.1} parent=11 // pred_check
          %p146 = pneg %p81
        $region18: #{tpu_custom_call.1} parent=11 // pred_check_branch
          %148 = sbr.rel (%p146) target = $region20
        $region19: #{tpu_custom_call.1} parent=11 // pred_region
          _
        $region20: #{tpu_custom_call.1} parent=11 // pred_fallthru
          _
        // Predicated region
        $region21: #{tpu_custom_call.1} parent=11 // pred_check
          %p149 = pneg %p102
        $region22: #{tpu_custom_call.1} parent=11 // pred_check_branch
          %151 = sbr.rel (%p149) target = $region24
        $region23: #{tpu_custom_call.1} parent=11 // pred_region
          _
        $region24: #{tpu_custom_call.1} parent=11 // pred_fallthru
          _
      $region12: #{tpu_custom_call.1} parent=5 // pred_fallthru
        _
      %p152 = scmp.lt.s32.totalorder %s13, 2
      // Predicated region
      $region25: #{tpu_custom_call.1} parent=5 // pred_check
        %p153 = pneg %p152
      $region26: #{tpu_custom_call.1} parent=5 // pred_check_branch
        %155 = sbr.rel (%p153) target = $region28
      $region27: #{tpu_custom_call.1} parent=5 // pred_region
        // Predicated region
        $region29: #{tpu_custom_call.1} parent=27 // pred_check
          %p156 = pneg %p33
        $region30: #{tpu_custom_call.1} parent=27 // pred_check_branch
          %158 = sbr.rel (%p156) target = $region32
        $region31: #{tpu_custom_call.1} parent=27 // pred_region
          %p159 = scmp.lt.s32.totalorder %s13, 1
          %s160 = scalar_select %p159, %s13, 1
          %s161 = smul.addr %s160, 2
          %s162 = smul.addr %s161, 8
          %s163 = scalar_lea.vmem %s0, %s162
        $region32: #{tpu_custom_call.1} parent=27 // pred_fallthru
          _
      $region28: #{tpu_custom_call.1} parent=5 // pred_fallthru
        _
      %p164 = scmp.le.s32.totalorder 1, %s13
      %p165 = scmp.lt.s32.totalorder %s13, 3
      %p166 = pnand %p164, %p165
      %p167 = pneg %p166
      // Predicated region
      $region33: #{tpu_custom_call.1} parent=5 // pred_check
        _
      $region34: #{tpu_custom_call.1} parent=5 // pred_check_branch
        %169 = sbr.rel (%p166) target = $region36
      $region35: #{tpu_custom_call.1} parent=5 // pred_region
        %s170 = ssub.s32 %s13, 1
        %p171 = scmp.lt.s32.totalorder %s18, 1
        %s172 = scalar_select %p171, %s18, 1
        %s173 = smul.addr %s172, 2
        %s174 = smul.addr %s173, 8
        %s175 = scalar_lea.vmem %s0, %s174
        %p176 = pneg %p39
        %p177 = pneg %p36
        %p178 = pneg %p60
        %p179 = pneg %p57
        %p180 = pneg %p81
        %p181 = pneg %p78
        %p182 = pneg %p102
        %p183 = pneg %p99
        %p184 = pneg %p128
        %p185 = pneg %p125
        %s186 = sand.u32 %s115, 1
        %s187 = scalar_lea.sflag [#allocation3], %s186
        %s188 = sand.u32 %s115, 1
        %s189 = scalar_lea.vmem [#allocation2], %s188
        %p190 = scmp.lt.s32.totalorder %s18, 1
        %s191 = scalar_select %p190, %s18, 1
        %s192 = smul.addr %s191, 2
        %s193 = smul.addr %s192, 8
        %s194 = scalar_lea.vmem %s0, %s193
        %v196 = vld [vmem:[%s194] sm:$0xff]
        %v197 = vld [vmem:[%s194 + $0x8] sm:$0xff]
        %198 = vrot.lane.b32.xlu0 %v196, 2
        %v199 = vpop.permute.xlu0 %198
        %200 = vrot.lane.b32.xlu0 %v197, 2
        %v201 = vpop.permute.xlu0 %200
        %v202 = vlaneseq
        %v203 = vand.u32 %v202, 127
        %vm204 = vcmp.lt.s32.totalorder %v203, 2
        %v205 = vsel %vm204, %v199, %v201
        %v206 = vsel %vm204, %v201, %v199
        %v207 = vld [vmem:[%s3] ss:$8 sm:$0x3]
        %v209 = vlaneseq
        %v210 = vshrl.u32 %v209, 7
        %v211 = vsub.s32 0, %v210
        %v212 = vrot.slane %v207, %v211
        %v213 = vlaneseq
        %v214 = vshrl.u32 %v213, 7
        %v215 = vsub.s32 1, %v214
        %v216 = vrot.slane %v207, %v215
        %v219 = vmul.f32 %v206, %v212
        %v220 = vmul.f32 %v205, %v216
        %221 = vrot.lane.b32.xlu0 %v196, 1
        %v222 = vpop.permute.xlu0 %221
        %223 = vrot.lane.b32.xlu0 %v197, 1
        %v224 = vpop.permute.xlu0 %223
        %vm225 = vcmp.lt.s32.totalorder %v203, 1
        %v226 = vsel %vm225, %v222, %v224
        %v227 = vsel %vm225, %v224, %v222
        %s228 = scalar_lea.vmem %s3, 1
        %v229 = vld [vmem:[%s228] ss:$8 sm:$0x3]
        %v231 = vlaneseq
        %v232 = vshrl.u32 %v231, 7
        %v233 = vsub.s32 0, %v232
        %v234 = vrot.slane %v229, %v233
        %v235 = vlaneseq
        %v236 = vshrl.u32 %v235, 7
        %v237 = vsub.s32 1, %v236
        %v238 = vrot.slane %v229, %v237
        %v241 = vmul.f32 %v227, %v234
        %v242 = vmul.f32 %v226, %v238
        %v243 = vpack.c.bf16 %v241, %v219
        %v244 = vpack.c.bf16 %v242, %v220
        %v245 = vpack.c.bf16 %v196, %v196
        %v246 = vpack.c.bf16 %v197, %v197
        %v247 = vld [vmem:[%s1] sm:$0xf]
        %v248 = vld [vmem:[%s1 + $0x4] sm:$0xf]
        %v249 = vld [vmem:[%s2] sm:$0xff]
        %v250 = vld [vmem:[%s2 + $0x8] sm:$0xff]
        %252 = vset.pattern.permute.xlu0 0
        %253 = vperm.xlu0 %252, %v249
        %v254 = vpop.permute.xlu0 %253
        %257 = vset.pattern.permute.xlu0 0
        %258 = vperm.xlu0 %257, %v250
        %v259 = vpop.permute.xlu0 %258
        %v263 = vunpack.c.l.b16 %v247
        %v264 = vunpack.c.l.b16 %v248
        %v265 = vpack.c.b16 %v264, %v263
        %vm266 = vcmask 195584
        %v268 = vsel %vm266, %v265, 0
        %vm270 = vcmask 1043456
        %v272 = vsel %vm270, %v245, 0
        %v275 = vsel %vm270, %v246, 0
        %277 = vmatprep.subr.bf16.mxu0 %v244
        %278 = vmatpush1.bf16.msra.mxu0 %v243
        %279 = vmatprep.subr.bf16.mxu0 %v275
        %280 = vmatpush1.bf16.msra.mxu0 %v272
        %281 = vmatprep.subr.bf16.mxu0 0
        %282 = vmatpush1.bf16.msra.mxu0 0
        %283 = vmatprep.subr.bf16.mxu0 0
        %284 = vmatpush1.bf16.msra.mxu0 0
        %285 = vmatprep.subr.bf16.mxu0 0
        %286 = vmatpush1.bf16.msra.mxu0 0
        %287 = vmatprep.subr.bf16.mxu0 0
        %288 = vmatpush1.bf16.msra.mxu0 0
        %289 = vmatprep.subr.bf16.mxu0 0
        %290 = vmatpush1.bf16.msra.mxu0 0
        %291 = vmatprep.subr.bf16.mxu0 0
        %292 = vmatpush1.bf16.msra.mxu0 0
        %293 = vmatprep.subr.bf16.mxu0 0
        %294 = vmatpush1.bf16.msra.mxu0 0
        %295 = vmatprep.subr.bf16.mxu0 0
        %296 = vmatpush1.bf16.msra.mxu0 0
        %297 = vmatprep.subr.bf16.mxu0 0
        %298 = vmatpush1.bf16.msra.mxu0 0
        %299 = vmatprep.subr.bf16.mxu0 0
        %300 = vmatpush1.bf16.msra.mxu0 0
        %301 = vmatprep.subr.bf16.mxu0 0
        %302 = vmatpush1.bf16.msra.mxu0 0
        %303 = vmatprep.subr.bf16.mxu0 0
        %304 = vmatpush1.bf16.msra.mxu0 0
        %305 = vmatprep.subr.bf16.mxu0 0
        %306 = vmatpush1.bf16.msra.mxu0 0
        %307 = vmatprep.subr.bf16.mxu0 0
        %308 = vmatpush1.bf16.msra.mxu0 0
        %309 = vmatprep.mubr.bf16.mxu0 0
        %310 = vmatmul.mubr.bf16.gmra.mrb[0].mxu0 %v268
        %v311 = vpop.f32.mrb[0].mxu0
        %v312 = vadd.f32 %v254, %v311
        %v313 = vpop.f32.mrb[0].mxu0
        %v314 = vadd.f32 %v254, %v313
        %v315 = vpop.f32.mrb[0].mxu0
        %v316 = vadd.f32 %v259, %v315
        %v317 = vpop.f32.mrb[0].mxu0
        %v318 = vadd.f32 %v259, %v317
        %319 = vdwg.mxu0
        %v320 = vmax.f32 %v312, 0.0
        %v321 = vmax.f32 %v314, 0.0
        %v322 = vmax.f32 %v316, 0.0
        %v323 = vmax.f32 %v318, 0.0
        %324 = vrot.lane.b32.xlu0 %v320, 2
        %v325 = vpop.permute.xlu0 %324
        %326 = vrot.lane.b32.xlu0 %v322, 2
        %v327 = vpop.permute.xlu0 %326
        %328 = vrot.lane.b32.xlu0 %v321, 2
        %v329 = vpop.permute.xlu0 %328
        %330 = vrot.lane.b32.xlu0 %v323, 2
        %v331 = vpop.permute.xlu0 %330
        %v332 = vsel %vm204, %v325, %v329
        %v333 = vsel %vm204, %v327, %v331
        %v334 = vsel %vm204, %v329, %v325
        %v335 = vsel %vm204, %v331, %v327
        %v336 = vmul.f32 %v334, %v212
        %v337 = vmul.f32 %v332, %v216
        %v338 = vmul.f32 %v335, %v212
        %v339 = vmul.f32 %v333, %v216
        %340 = vrot.lane.b32.xlu0 %v320, 1
        %v341 = vpop.permute.xlu0 %340
        %342 = vrot.lane.b32.xlu0 %v322, 1
        %v343 = vpop.permute.xlu0 %342
        %344 = vrot.lane.b32.xlu0 %v321, 1
        %v345 = vpop.permute.xlu0 %344
        %346 = vrot.lane.b32.xlu0 %v323, 1
        %v347 = vpop.permute.xlu0 %346
        %v348 = vsel %vm225, %v341, %v345
        %v349 = vsel %vm225, %v343, %v347
        %v350 = vsel %vm225, %v345, %v341
        %v351 = vsel %vm225, %v347, %v343
        %v352 = vmul.f32 %v350, %v234
        %v353 = vmul.f32 %v348, %v238
        %v354 = vmul.f32 %v351, %v234
        %v355 = vmul.f32 %v349, %v238
        %v356 = vpack.c.bf16 %v338, %v336
        %v357 = vpack.c.bf16 %v339, %v337
        %v358 = vpack.c.bf16 %v354, %v352
        %v359 = vpack.c.bf16 %v355, %v353
        %v360 = vpack.c.bf16 %v322, %v320
        %v361 = vpack.c.bf16 %v323, %v321
        %v362 = vld [vmem:[%s1 + $0x8] sm:$0xf]
        %v363 = vld [vmem:[%s1 + $0xc] sm:$0xf]
        %v364 = vld [vmem:[%s2 + $0x10] sm:$0xff]
        %v365 = vld [vmem:[%s2 + $0x18] sm:$0xff]
        %367 = vset.pattern.permute.xlu0 0
        %368 = vperm.xlu0 %367, %v364
        %v369 = vpop.permute.xlu0 %368
        %372 = vset.pattern.permute.xlu0 0
        %373 = vperm.xlu0 %372, %v365
        %v374 = vpop.permute.xlu0 %373
        %v378 = vunpack.c.l.b16 %v362
        %v379 = vunpack.c.l.b16 %v363
        %v380 = vpack.c.b16 %v379, %v378
        %vm381 = vcmask 392192
        %v383 = vsel %vm381, %v380, 0
        %385 = vmatprep.subr.bf16.mxu0 %v357
        %386 = vmatpush1.bf16.msra.mxu0 %v356
        %387 = vmatprep.subr.bf16.mxu0 %v359
        %388 = vmatpush1.bf16.msra.mxu0 %v358
        %389 = vmatprep.subr.bf16.mxu0 %v361
        %390 = vmatpush1.bf16.msra.mxu0 %v360
        %391 = vmatprep.subr.bf16.mxu0 0
        %392 = vmatpush1.bf16.msra.mxu0 0
        %393 = vmatprep.subr.bf16.mxu0 0
        %394 = vmatpush1.bf16.msra.mxu0 0
        %395 = vmatprep.subr.bf16.mxu0 0
        %396 = vmatpush1.bf16.msra.mxu0 0
        %397 = vmatprep.subr.bf16.mxu0 0
        %398 = vmatpush1.bf16.msra.mxu0 0
        %399 = vmatprep.subr.bf16.mxu0 0
        %400 = vmatpush1.bf16.msra.mxu0 0
        %401 = vmatprep.subr.bf16.mxu0 0
        %402 = vmatpush1.bf16.msra.mxu0 0
        %403 = vmatprep.subr.bf16.mxu0 0
        %404 = vmatpush1.bf16.msra.mxu0 0
        %405 = vmatprep.subr.bf16.mxu0 0
        %406 = vmatpush1.bf16.msra.mxu0 0
        %407 = vmatprep.subr.bf16.mxu0 0
        %408 = vmatpush1.bf16.msra.mxu0 0
        %409 = vmatprep.subr.bf16.mxu0 0
        %410 = vmatpush1.bf16.msra.mxu0 0
        %411 = vmatprep.subr.bf16.mxu0 0
        %412 = vmatpush1.bf16.msra.mxu0 0
        %413 = vmatprep.subr.bf16.mxu0 0
        %414 = vmatpush1.bf16.msra.mxu0 0
        %415 = vmatprep.subr.bf16.mxu0 0
        %416 = vmatpush1.bf16.msra.mxu0 0
        %417 = vmatprep.mubr.bf16.mxu0 0
        %418 = vmatmul.mubr.bf16.gmra.mrb[0].mxu0 %v383
        %v419 = vpop.f32.mrb[0].mxu0
        %v420 = vadd.f32 %v369, %v419
        %v421 = vpop.f32.mrb[0].mxu0
        %v422 = vadd.f32 %v369, %v421
        %v423 = vpop.f32.mrb[0].mxu0
        %v424 = vadd.f32 %v374, %v423
        %v425 = vpop.f32.mrb[0].mxu0
        %v426 = vadd.f32 %v374, %v425
        %427 = vdwg.mxu0
        %v428 = vmax.f32 %v420, 0.0
        %v429 = vmax.f32 %v422, 0.0
        %v430 = vmax.f32 %v424, 0.0
        %v431 = vmax.f32 %v426, 0.0
        %v432 = vld [vmem:[%s1 + $0x10] sm:$0xf]
        %v433 = vld [vmem:[%s1 + $0x14] sm:$0xf]
        %v434 = vld [vmem:[%s2 + $0x20] sm:$0xff]
        %v435 = vld [vmem:[%s2 + $0x28] sm:$0xff]
        %437 = vset.pattern.permute.xlu0 0
        %438 = vperm.xlu0 %437, %v434
        %v439 = vpop.permute.xlu0 %438
        %442 = vset.pattern.permute.xlu0 0
        %443 = vperm.xlu0 %442, %v435
        %v444 = vpop.permute.xlu0 %443
        %v448 = vunpack.c.l.b16 %v432
        %v449 = vunpack.c.l.b16 %v433
        %v450 = vpack.c.b16 %v449, %v448
        %vm451 = vcmask 64512
        %v453 = vsel %vm451, %v450, 0
        %455 = vmatprep.subr.bf16.mxu0 %v275
        %456 = vmatpush1.bf16.msra.mxu0 %v272
        %457 = vmatprep.subr.bf16.mxu0 0
        %458 = vmatpush1.bf16.msra.mxu0 0
        %459 = vmatprep.subr.bf16.mxu0 0
        %460 = vmatpush1.bf16.msra.mxu0 0
        %461 = vmatprep.subr.bf16.mxu0 0
        %462 = vmatpush1.bf16.msra.mxu0 0
        %463 = vmatprep.subr.bf16.mxu0 0
        %464 = vmatpush1.bf16.msra.mxu0 0
        %465 = vmatprep.subr.bf16.mxu0 0
        %466 = vmatpush1.bf16.msra.mxu0 0
        %467 = vmatprep.subr.bf16.mxu0 0
        %468 = vmatpush1.bf16.msra.mxu0 0
        %469 = vmatprep.subr.bf16.mxu0 0
        %470 = vmatpush1.bf16.msra.mxu0 0
        %471 = vmatprep.subr.bf16.mxu0 0
        %472 = vmatpush1.bf16.msra.mxu0 0
        %473 = vmatprep.subr.bf16.mxu0 0
        %474 = vmatpush1.bf16.msra.mxu0 0
        %475 = vmatprep.subr.bf16.mxu0 0
        %476 = vmatpush1.bf16.msra.mxu0 0
        %477 = vmatprep.subr.bf16.mxu0 0
        %478 = vmatpush1.bf16.msra.mxu0 0
        %479 = vmatprep.subr.bf16.mxu0 0
        %480 = vmatpush1.bf16.msra.mxu0 0
        %481 = vmatprep.subr.bf16.mxu0 0
        %482 = vmatpush1.bf16.msra.mxu0 0
        %483 = vmatprep.subr.bf16.mxu0 0
        %484 = vmatpush1.bf16.msra.mxu0 0
        %485 = vmatprep.subr.bf16.mxu0 0
        %486 = vmatpush1.bf16.msra.mxu0 0
        %487 = vmatprep.mubr.bf16.mxu0 0
        %488 = vmatmul.mubr.bf16.gmra.mrb[0].mxu0 %v453
        %v489 = vpop.f32.mrb[0].mxu0
        %v490 = vadd.f32 %v439, %v489
        %v491 = vpop.f32.mrb[0].mxu0
        %v492 = vadd.f32 %v439, %v491
        %v493 = vpop.f32.mrb[0].mxu0
        %v494 = vadd.f32 %v444, %v493
        %v495 = vpop.f32.mrb[0].mxu0
        %v496 = vadd.f32 %v444, %v495
        %497 = vdwg.mxu0
        %v498 = vadd.f32 %v428, %v490
        %v499 = vadd.f32 %v429, %v492
        %v500 = vadd.f32 %v430, %v494
        %v501 = vadd.f32 %v431, %v496
        %502 = vrot.lane.b32.xlu0 %v498, 4
        %v503 = vpop.permute.xlu0 %502
        %504 = vrot.lane.b32.xlu0 %v500, 4
        %v505 = vpop.permute.xlu0 %504
        %506 = vrot.lane.b32.xlu0 %v499, 4
        %v507 = vpop.permute.xlu0 %506
        %508 = vrot.lane.b32.xlu0 %v501, 4
        %v509 = vpop.permute.xlu0 %508
        %vm510 = vcmp.lt.s32.totalorder %v203, 4
        %v511 = vsel %vm510, %v503, %v507
        %v512 = vsel %vm510, %v505, %v509
        %v513 = vsel %vm510, %v507, %v503
        %v514 = vsel %vm510, %v509, %v505
        %s515 = scalar_lea.vmem %s3, 2
        %v516 = vld [vmem:[%s515] ss:$8 sm:$0x3]
        %v518 = vlaneseq
        %v519 = vshrl.u32 %v518, 7
        %v520 = vsub.s32 0, %v519
        %v521 = vrot.slane %v516, %v520
        %v522 = vlaneseq
        %v523 = vshrl.u32 %v522, 7
        %v524 = vsub.s32 1, %v523
        %v525 = vrot.slane %v516, %v524
        %v528 = vmul.f32 %v513, %v521
        %v529 = vmul.f32 %v511, %v525
        %v530 = vmul.f32 %v514, %v521
        %v531 = vmul.f32 %v512, %v525
        %532 = vrot.lane.b32.xlu0 %v498, 2
        %v533 = vpop.permute.xlu0 %532
        %534 = vrot.lane.b32.xlu0 %v500, 2
        %v535 = vpop.permute.xlu0 %534
        %536 = vrot.lane.b32.xlu0 %v499, 2
        %v537 = vpop.permute.xlu0 %536
        %538 = vrot.lane.b32.xlu0 %v501, 2
        %v539 = vpop.permute.xlu0 %538
        %v540 = vsel %vm204, %v533, %v537
        %v541 = vsel %vm204, %v535, %v539
        %v542 = vsel %vm204, %v537, %v533
        %v543 = vsel %vm204, %v539, %v535
        %s544 = scalar_lea.vmem %s3, 3
        %v545 = vld [vmem:[%s544] ss:$8 sm:$0x3]
        %v547 = vlaneseq
        %v548 = vshrl.u32 %v547, 7
        %v549 = vsub.s32 0, %v548
        %v550 = vrot.slane %v545, %v549
        %v551 = vlaneseq
        %v552 = vshrl.u32 %v551, 7
        %v553 = vsub.s32 1, %v552
        %v554 = vrot.slane %v545, %v553
        %v557 = vmul.f32 %v542, %v550
        %v558 = vmul.f32 %v540, %v554
        %v559 = vmul.f32 %v543, %v550
        %v560 = vmul.f32 %v541, %v554
        %v561 = vpack.c.bf16 %v530, %v528
        %v562 = vpack.c.bf16 %v531, %v529
        %v563 = vpack.c.bf16 %v559, %v557
        %v564 = vpack.c.bf16 %v560, %v558
        %v565 = vpack.c.bf16 %v500, %v498
        %v566 = vpack.c.bf16 %v501, %v499
        %v567 = vld [vmem:[%s1 + $0x18] sm:$0xf]
        %v568 = vld [vmem:[%s1 + $0x1c] sm:$0xf]
        %v569 = vld [vmem:[%s2 + $0x30] sm:$0xff]
        %v570 = vld [vmem:[%s2 + $0x38] sm:$0xff]
        %572 = vset.pattern.permute.xlu0 0
        %573 = vperm.xlu0 %572, %v569
        %v574 = vpop.permute.xlu0 %573
        %577 = vset.pattern.permute.xlu0 0
        %578 = vperm.xlu0 %577, %v570
        %v579 = vpop.permute.xlu0 %578
        %v583 = vunpack.c.l.b16 %v567
        %v584 = vunpack.c.l.b16 %v568
        %v585 = vpack.c.b16 %v584, %v583
        %v587 = vsel %vm381, %v585, 0
        %589 = vmatprep.subr.bf16.mxu0 %v562
        %590 = vmatpush1.bf16.msra.mxu0 %v561
        %591 = vmatprep.subr.bf16.mxu0 %v564
        %592 = vmatpush1.bf16.msra.mxu0 %v563
        %593 = vmatprep.subr.bf16.mxu0 %v566
        %594 = vmatpush1.bf16.msra.mxu0 %v565
        %595 = vmatprep.subr.bf16.mxu0 0
        %596 = vmatpush1.bf16.msra.mxu0 0
        %597 = vmatprep.subr.bf16.mxu0 0
        %598 = vmatpush1.bf16.msra.mxu0 0
        %599 = vmatprep.subr.bf16.mxu0 0
        %600 = vmatpush1.bf16.msra.mxu0 0
        %601 = vmatprep.subr.bf16.mxu0 0
        %602 = vmatpush1.bf16.msra.mxu0 0
        %603 = vmatprep.subr.bf16.mxu0 0
        %604 = vmatpush1.bf16.msra.mxu0 0
        %605 = vmatprep.subr.bf16.mxu0 0
        %606 = vmatpush1.bf16.msra.mxu0 0
        %607 = vmatprep.subr.bf16.mxu0 0
        %608 = vmatpush1.bf16.msra.mxu0 0
        %609 = vmatprep.subr.bf16.mxu0 0
        %610 = vmatpush1.bf16.msra.mxu0 0
        %611 = vmatprep.subr.bf16.mxu0 0
        %612 = vmatpush1.bf16.msra.mxu0 0
        %613 = vmatprep.subr.bf16.mxu0 0
        %614 = vmatpush1.bf16.msra.mxu0 0
        %615 = vmatprep.subr.bf16.mxu0 0
        %616 = vmatpush1.bf16.msra.mxu0 0
        %617 = vmatprep.subr.bf16.mxu0 0
        %618 = vmatpush1.bf16.msra.mxu0 0
        %619 = vmatprep.subr.bf16.mxu0 0
        %620 = vmatpush1.bf16.msra.mxu0 0
        %621 = vmatprep.mubr.bf16.mxu0 0
        %622 = vmatmul.mubr.bf16.gmra.mrb[0].mxu0 %v587
        %v623 = vpop.f32.mrb[0].mxu0
        %v624 = vadd.f32 %v574, %v623
        %v625 = vpop.f32.mrb[0].mxu0
        %v626 = vadd.f32 %v574, %v625
        %v627 = vpop.f32.mrb[0].mxu0
        %v628 = vadd.f32 %v579, %v627
        %v629 = vpop.f32.mrb[0].mxu0
        %v630 = vadd.f32 %v579, %v629
        %631 = vdwg.mxu0
        %v632 = vmax.f32 %v624, 0.0
        %v633 = vmax.f32 %v626, 0.0
        %v634 = vmax.f32 %v628, 0.0
        %v635 = vmax.f32 %v630, 0.0
        %636 = vrot.lane.b32.xlu0 %v632, 4
        %v637 = vpop.permute.xlu0 %636
        %638 = vrot.lane.b32.xlu0 %v634, 4
        %v639 = vpop.permute.xlu0 %638
        %640 = vrot.lane.b32.xlu0 %v633, 4
        %v641 = vpop.permute.xlu0 %640
        %642 = vrot.lane.b32.xlu0 %v635, 4
        %v643 = vpop.permute.xlu0 %642
        %v644 = vsel %vm510, %v637, %v641
        %v645 = vsel %vm510, %v639, %v643
        %v646 = vsel %vm510, %v641, %v637
        %v647 = vsel %vm510, %v643, %v639
        %v648 = vmul.f32 %v646, %v521
        %v649 = vmul.f32 %v644, %v525
        %v650 = vmul.f32 %v647, %v521
        %v651 = vmul.f32 %v645, %v525
        %652 = vrot.lane.b32.xlu0 %v632, 2
        %v653 = vpop.permute.xlu0 %652
        %654 = vrot.lane.b32.xlu0 %v634, 2
        %v655 = vpop.permute.xlu0 %654
        %656 = vrot.lane.b32.xlu0 %v633, 2
        %v657 = vpop.permute.xlu0 %656
        %658 = vrot.lane.b32.xlu0 %v635, 2
        %v659 = vpop.permute.xlu0 %658
        %v660 = vsel %vm204, %v653, %v657
        %v661 = vsel %vm204, %v655, %v659
        %v662 = vsel %vm204, %v657, %v653
        %v663 = vsel %vm204, %v659, %v655
        %v664 = vmul.f32 %v662, %v550
        %v665 = vmul.f32 %v660, %v554
        %v666 = vmul.f32 %v663, %v550
        %v667 = vmul.f32 %v661, %v554
        %v668 = vpack.c.bf16 %v650, %v648
        %v669 = vpack.c.bf16 %v651, %v649
        %v670 = vpack.c.bf16 %v666, %v664
        %v671 = vpack.c.bf16 %v667, %v665
        %v672 = vpack.c.bf16 %v634, %v632
        %v673 = vpack.c.bf16 %v635, %v633
        %v674 = vld [vmem:[%s1 + $0x20] sm:$0xf]
        %v675 = vld [vmem:[%s1 + $0x24] sm:$0xf]
        %v676 = vld [vmem:[%s2 + $0x40] sm:$0xff]
        %v677 = vld [vmem:[%s2 + $0x48] sm:$0xff]
        %679 = vset.pattern.permute.xlu0 0
        %680 = vperm.xlu0 %679, %v676
        %v681 = vpop.permute.xlu0 %680
        %684 = vset.pattern.permute.xlu0 0
        %685 = vperm.xlu0 %684, %v677
        %v686 = vpop.permute.xlu0 %685
        %v690 = vunpack.c.l.b16 %v674
        %v691 = vunpack.c.l.b16 %v675
        %v692 = vpack.c.b16 %v691, %v690
        %v694 = vsel %vm381, %v692, 0
        %696 = vmatprep.subr.bf16.mxu0 %v669
        %697 = vmatpush1.bf16.msra.mxu0 %v668
        %698 = vmatprep.subr.bf16.mxu0 %v671
        %699 = vmatpush1.bf16.msra.mxu0 %v670
        %700 = vmatprep.subr.bf16.mxu0 %v673
        %701 = vmatpush1.bf16.msra.mxu0 %v672
        %702 = vmatprep.subr.bf16.mxu0 0
        %703 = vmatpush1.bf16.msra.mxu0 0
        %704 = vmatprep.subr.bf16.mxu0 0
        %705 = vmatpush1.bf16.msra.mxu0 0
        %706 = vmatprep.subr.bf16.mxu0 0
        %707 = vmatpush1.bf16.msra.mxu0 0
        %708 = vmatprep.subr.bf16.mxu0 0
        %709 = vmatpush1.bf16.msra.mxu0 0
        %710 = vmatprep.subr.bf16.mxu0 0
        %711 = vmatpush1.bf16.msra.mxu0 0
        %712 = vmatprep.subr.bf16.mxu0 0
        %713 = vmatpush1.bf16.msra.mxu0 0
        %714 = vmatprep.subr.bf16.mxu0 0
        %715 = vmatpush1.bf16.msra.mxu0 0
        %716 = vmatprep.subr.bf16.mxu0 0
        %717 = vmatpush1.bf16.msra.mxu0 0
        %718 = vmatprep.subr.bf16.mxu0 0
        %719 = vmatpush1.bf16.msra.mxu0 0
        %720 = vmatprep.subr.bf16.mxu0 0
        %721 = vmatpush1.bf16.msra.mxu0 0
        %722 = vmatprep.subr.bf16.mxu0 0
        %723 = vmatpush1.bf16.msra.mxu0 0
        %724 = vmatprep.subr.bf16.mxu0 0
        %725 = vmatpush1.bf16.msra.mxu0 0
        %726 = vmatprep.subr.bf16.mxu0 0
        %727 = vmatpush1.bf16.msra.mxu0 0
        %728 = vmatprep.mubr.bf16.mxu0 0
        %729 = vmatmul.mubr.bf16.gmra.mrb[0].mxu0 %v694
        %v730 = vpop.f32.mrb[0].mxu0
        %v731 = vadd.f32 %v681, %v730
        %v732 = vpop.f32.mrb[0].mxu0
        %v733 = vadd.f32 %v681, %v732
        %v734 = vpop.f32.mrb[0].mxu0
        %v735 = vadd.f32 %v686, %v734
        %v736 = vpop.f32.mrb[0].mxu0
        %v737 = vadd.f32 %v686, %v736
        %738 = vdwg.mxu0
        %v739 = vmax.f32 %v731, 0.0
        %v740 = vmax.f32 %v733, 0.0
        %v741 = vmax.f32 %v735, 0.0
        %v742 = vmax.f32 %v737, 0.0
        %v743 = vadd.f32 %v739, %v498
        %v744 = vadd.f32 %v740, %v499
        %v745 = vadd.f32 %v741, %v500
        %v746 = vadd.f32 %v742, %v501
        %v747 = vlaneseq
        %v748 = vshrl.u32 %v747, 7
        %v749 = vadd.s32 %v748, 8
        %v750 = vadd.s32 %v748, 16
        %v751 = vadd.s32 %v748, 24
        %v752 = vadd.s32 %v748, 32
        %v753 = vadd.s32 %v748, 40
        %v754 = vadd.s32 %v748, 48
        %v755 = vadd.s32 %v748, 56
        %v756 = vadd.s32 %v748, 64
        %v757 = vadd.s32 %v748, 72
        %v758 = vadd.s32 %v748, 80
        %v759 = vadd.s32 %v748, 88
        %v760 = vadd.s32 %v748, 96
        %v761 = vadd.s32 %v748, 104
        %v762 = vadd.s32 %v748, 112
        %v763 = vadd.s32 %v748, 120
        %v764 = vadd.s32 %v748, 128
        %v765 = vadd.s32 %v748, 136
        %v766 = vadd.s32 %v748, 144
        %v767 = vadd.s32 %v748, 152
        %v768 = vadd.s32 %v748, 160
        %v769 = vadd.s32 %v748, 168
        %v770 = vadd.s32 %v748, 176
        %v771 = vadd.s32 %v748, 184
        %v772 = vadd.s32 %v748, 192
        %v773 = vadd.s32 %v748, 200
        %v774 = vadd.s32 %v748, 208
        %v775 = vadd.s32 %v748, 216
        %v776 = vadd.s32 %v748, 224
        %v777 = vadd.s32 %v748, 232
        %v778 = vadd.s32 %v748, 240
        %v779 = vadd.s32 %v748, 248
        %v780 = vmul.u32 %v203, 128
        %v781 = vadd.s32 %v780, 127
        %vm782 = vcmp.eq.s32.totalorder %v748, %v781
        %vm783 = vcmp.eq.s32.totalorder %v749, %v781
        %vm784 = vcmp.eq.s32.totalorder %v750, %v781
        %vm785 = vcmp.eq.s32.totalorder %v751, %v781
        %vm786 = vcmp.eq.s32.totalorder %v752, %v781
        %vm787 = vcmp.eq.s32.totalorder %v753, %v781
        %vm788 = vcmp.eq.s32.totalorder %v754, %v781
        %vm789 = vcmp.eq.s32.totalorder %v755, %v781
        %vm790 = vcmp.eq.s32.totalorder %v756, %v781
        %vm791 = vcmp.eq.s32.totalorder %v757, %v781
        %vm792 = vcmp.eq.s32.totalorder %v758, %v781
        %vm793 = vcmp.eq.s32.totalorder %v759, %v781
        %vm794 = vcmp.eq.s32.totalorder %v760, %v781
        %vm795 = vcmp.eq.s32.totalorder %v761, %v781
        %vm796 = vcmp.eq.s32.totalorder %v762, %v781
        %vm797 = vcmp.eq.s32.totalorder %v763, %v781
        %vm798 = vcmp.eq.s32.totalorder %v764, %v781
        %vm799 = vcmp.eq.s32.totalorder %v765, %v781
        %vm800 = vcmp.eq.s32.totalorder %v766, %v781
        %vm801 = vcmp.eq.s32.totalorder %v767, %v781
        %vm802 = vcmp.eq.s32.totalorder %v768, %v781
        %vm803 = vcmp.eq.s32.totalorder %v769, %v781
        %vm804 = vcmp.eq.s32.totalorder %v770, %v781
        %vm805 = vcmp.eq.s32.totalorder %v771, %v781
        %vm806 = vcmp.eq.s32.totalorder %v772, %v781
        %vm807 = vcmp.eq.s32.totalorder %v773, %v781
        %vm808 = vcmp.eq.s32.totalorder %v774, %v781
        %vm809 = vcmp.eq.s32.totalorder %v775, %v781
        %vm810 = vcmp.eq.s32.totalorder %v776, %v781
        %vm811 = vcmp.eq.s32.totalorder %v777, %v781
        %vm812 = vcmp.eq.s32.totalorder %v778, %v781
        %vm813 = vcmp.eq.s32.totalorder %v779, %v781
        %v814 = vsel %vm782, 1, 0
        %v815 = vsel %vm783, 1, 0
        %v816 = vsel %vm784, 1, 0
        %v817 = vsel %vm785, 1, 0
        %v818 = vsel %vm786, 1, 0
        %v819 = vsel %vm787, 1, 0
        %v820 = vsel %vm788, 1, 0
        %v821 = vsel %vm789, 1, 0
        %v822 = vsel %vm790, 1, 0
        %v823 = vsel %vm791, 1, 0
        %v824 = vsel %vm792, 1, 0
        %v825 = vsel %vm793, 1, 0
        %v826 = vsel %vm794, 1, 0
        %v827 = vsel %vm795, 1, 0
        %v828 = vsel %vm796, 1, 0
        %v829 = vsel %vm797, 1, 0
        %v830 = vsel %vm798, 1, 0
        %v831 = vsel %vm799, 1, 0
        %v832 = vsel %vm800, 1, 0
        %v833 = vsel %vm801, 1, 0
        %v834 = vsel %vm802, 1, 0
        %v835 = vsel %vm803, 1, 0
        %v836 = vsel %vm804, 1, 0
        %v837 = vsel %vm805, 1, 0
        %v838 = vsel %vm806, 1, 0
        %v839 = vsel %vm807, 1, 0
        %v840 = vsel %vm808, 1, 0
        %v841 = vsel %vm809, 1, 0
        %v842 = vsel %vm810, 1, 0
        %v843 = vsel %vm811, 1, 0
        %v844 = vsel %vm812, 1, 0
        %v845 = vsel %vm813, 1, 0
        %v846 = vcvt.s32.f32 %v814
        %v847 = vcvt.s32.f32 %v815
        %v848 = vcvt.s32.f32 %v816
        %v849 = vcvt.s32.f32 %v817
        %v850 = vcvt.s32.f32 %v818
        %v851 = vcvt.s32.f32 %v819
        %v852 = vcvt.s32.f32 %v820
        %v853 = vcvt.s32.f32 %v821
        %v854 = vcvt.s32.f32 %v822
        %v855 = vcvt.s32.f32 %v823
        %v856 = vcvt.s32.f32 %v824
        %v857 = vcvt.s32.f32 %v825
        %v858 = vcvt.s32.f32 %v826
        %v859 = vcvt.s32.f32 %v827
        %v860 = vcvt.s32.f32 %v828
        %v861 = vcvt.s32.f32 %v829
        %v862 = vcvt.s32.f32 %v830
        %v863 = vcvt.s32.f32 %v831
        %v864 = vcvt.s32.f32 %v832
        %v865 = vcvt.s32.f32 %v833
        %v866 = vcvt.s32.f32 %v834
        %v867 = vcvt.s32.f32 %v835
        %v868 = vcvt.s32.f32 %v836
        %v869 = vcvt.s32.f32 %v837
        %v870 = vcvt.s32.f32 %v838
        %v871 = vcvt.s32.f32 %v839
        %v872 = vcvt.s32.f32 %v840
        %v873 = vcvt.s32.f32 %v841
        %v874 = vcvt.s32.f32 %v842
        %v875 = vcvt.s32.f32 %v843
        %v876 = vcvt.s32.f32 %v844
        %v877 = vcvt.s32.f32 %v845
        %878 = vmatprep.subr.mxu0 0.0
        %879 = vmatpush1.msra.mxu0 %v846
        %880 = vmatprep.subr.mxu0 0.0
        %881 = vmatpush1.msra.mxu0 %v847
        %882 = vmatprep.subr.mxu0 0.0
        %883 = vmatpush1.msra.mxu0 %v848
        %884 = vmatprep.subr.mxu0 0.0
        %885 = vmatpush1.msra.mxu0 %v849
        %886 = vmatprep.subr.mxu0 0.0
        %887 = vmatpush1.msra.mxu0 %v850
        %888 = vmatprep.subr.mxu0 0.0
        %889 = vmatpush1.msra.mxu0 %v851
        %890 = vmatprep.subr.mxu0 0.0
        %891 = vmatpush1.msra.mxu0 %v852
        %892 = vmatprep.subr.mxu0 0.0
        %893 = vmatpush1.msra.mxu0 %v853
        %894 = vmatprep.subr.mxu0 0.0
        %895 = vmatpush1.msra.mxu0 %v854
        %896 = vmatprep.subr.mxu0 0.0
        %897 = vmatpush1.msra.mxu0 %v855
        %898 = vmatprep.subr.mxu0 0.0
        %899 = vmatpush1.msra.mxu0 %v856
        %900 = vmatprep.subr.mxu0 0.0
        %901 = vmatpush1.msra.mxu0 %v857
        %902 = vmatprep.subr.mxu0 0.0
        %903 = vmatpush1.msra.mxu0 %v858
        %904 = vmatprep.subr.mxu0 0.0
        %905 = vmatpush1.msra.mxu0 %v859
        %906 = vmatprep.subr.mxu0 0.0
        %907 = vmatpush1.msra.mxu0 %v860
        %908 = vmatprep.subr.mxu0 0.0
        %909 = vmatpush1.msra.mxu0 %v861
        %910 = vmatprep.subr.mxu0 0.0
        %911 = vmatpush1.msra.mxu0 %v862
        %912 = vmatprep.subr.mxu0 0.0
        %913 = vmatpush1.msra.mxu0 %v863
        %914 = vmatprep.subr.mxu0 0.0
        %915 = vmatpush1.msra.mxu0 %v864
        %916 = vmatprep.subr.mxu0 0.0
        %917 = vmatpush1.msra.mxu0 %v865
        %918 = vmatprep.subr.mxu0 0.0
        %919 = vmatpush1.msra.mxu0 %v866
        %920 = vmatprep.subr.mxu0 0.0
        %921 = vmatpush1.msra.mxu0 %v867
        %922 = vmatprep.subr.mxu0 0.0
        %923 = vmatpush1.msra.mxu0 %v868
        %924 = vmatprep.subr.mxu0 0.0
        %925 = vmatpush1.msra.mxu0 %v869
        %926 = vmatprep.subr.mxu0 0.0
        %927 = vmatpush1.msra.mxu0 %v870
        %928 = vmatprep.subr.mxu0 0.0
        %929 = vmatpush1.msra.mxu0 %v871
        %930 = vmatprep.subr.mxu0 0.0
        %931 = vmatpush1.msra.mxu0 %v872
        %932 = vmatprep.subr.mxu0 0.0
        %933 = vmatpush1.msra.mxu0 %v873
        %934 = vmatprep.subr.mxu0 0.0
        %935 = vmatpush1.msra.mxu0 %v874
        %936 = vmatprep.subr.mxu0 0.0
        %937 = vmatpush1.msra.mxu0 %v875
        %938 = vmatprep.subr.mxu0 0.0
        %939 = vmatpush1.msra.mxu0 %v876
        %940 = vmatprep.subr.mxu0 0.0
        %941 = vmatpush1.msra.mxu0 %v877
        %942 = vmatprep.mubr.f32.mxu0 %v744
        %943 = vmatmul.mubr.f32.gmra.mrb[0].mxu0 %v743
        %v944 = vpop.f32.mrb[0].mxu0
        %v945 = vadd.f32 0.0, %v944
        %v946 = vpop.f32.mrb[0].mxu0
        %947 = vmatprep.mubr.f32.mxu0 %v746
        %948 = vmatmul.mubr.f32.gmra.mrb[0].mxu0 %v745
        %v949 = vpop.f32.mrb[0].mxu0
        %v950 = vadd.f32 0.0, %v949
        %v951 = vpop.f32.mrb[0].mxu0
        %952 = vdwg.mxu0
        %v953 = vld [vmem:[%s2 + $0x50] sm:$0xff]
        %v954 = vld [vmem:[%s2 + $0x58] sm:$0xff]
        %956 = vset.pattern.permute.xlu0 0
        %957 = vperm.xlu0 %956, %v953
        %v958 = vpop.permute.xlu0 %957
        %961 = vset.pattern.permute.xlu0 0
        %962 = vperm.xlu0 %961, %v954
        %v963 = vpop.permute.xlu0 %962
        %v965 = vmul.f32 %v958, %v945
        %v966 = vmul.f32 %v963, %v950
        %vm967 = vcmask 15360
        %v968 = vsel %vm967, %v965, 0.0
        %v969 = vsel %vm967, %v966, 0.0
        %v970 = vadd.f32 %v968, %v969
        %v971 = vrot.slane %v970, 4
        %v972 = vadd.f32 %v970, %v971
        %v973 = vrot.slane %v972, 2
        %v974 = vadd.f32 %v972, %v973
        %v975 = vrot.slane %v974, 1
        %v976 = vadd.f32 %v974, %v975
        %v977 = vld [vmem:[%s2 + $0x60] sm:$0x1]
        %979 = vset.pattern.permute.xlu0 0
        %980 = vperm.xlu0 %979, %v977
        %v981 = vpop.permute.xlu0 %980
        %v983 = vadd.f32 %v976, %v981
        %vm984 = vcmask 8192
        %985 = vst.msk [vmem:[%s189] sm:$0x1] %vm984, %v983
        %s986 = sand.u32 %s115, 1
        %s987 = scalar_lea.sflag [#allocation3], %s986
        %s988 = sand.u32 %s115, 1
        %s989 = scalar_lea.vmem [#allocation2], %s988
        // Predicated region
        $region37: #{tpu_custom_call.1} parent=35 // pred_check
          %p990 = pneg %p125
        $region38: #{tpu_custom_call.1} parent=35 // pred_check_branch
          %992 = sbr.rel (%p990) target = $region40
        $region39: #{tpu_custom_call.1} parent=35 // pred_region
          %s994 = ssub.s32 16, 16
          %995 = vsyncadd %s987, %s994
          %s996 = smul.addr %s18, 16
          %s997 = scalar_lea.hbm %s4, %s996
          %s999 = sshll.u32 %s989, 4
          %s1000 = int_to_ptr.vmem [resolvable:$true] %s999
          %1002 = dma.vmem_to_hbm [thread:$0]  %s1000, 16, %s997, %s987
        $region40: #{tpu_custom_call.1} parent=35 // pred_fallthru
          _
      $region36: #{tpu_custom_call.1} parent=5 // pred_fallthru
        _
      %p1003 = scmp.le.s32.totalorder 2, %s13
      // Predicated region
      $region41: #{tpu_custom_call.1} parent=5 // pred_check
        %p1004 = pneg %p1003
      $region42: #{tpu_custom_call.1} parent=5 // pred_check_branch
        %1006 = sbr.rel (%p1004) target = $region44
      $region43: #{tpu_custom_call.1} parent=5 // pred_region
        %s1007 = ssub.s32 %s13, 2
        // Predicated region
        $region45: #{tpu_custom_call.1} parent=43 // pred_check
          %p1008 = pneg %p131
        $region46: #{tpu_custom_call.1} parent=43 // pred_check_branch
          %1010 = sbr.rel (%p1008) target = $region48
        $region47: #{tpu_custom_call.1} parent=43 // pred_region
          %s1011 = sand.u32 %s116, 1
          %s1012 = scalar_lea.sflag [#allocation3], %s1011
          %s1013 = sand.u32 %s116, 1
          %s1014 = scalar_lea.vmem [#allocation2], %s1013
          %1015 = dma.done %s1012, 16
        $region48: #{tpu_custom_call.1} parent=43 // pred_fallthru
          _
      $region44: #{tpu_custom_call.1} parent=5 // pred_fallthru
        _
    $region6: #{tpu_custom_call.1} parent=1 // loop_footer
      %s17 = sadd.s32 1, %s13
    $region7: #{tpu_custom_call.1} parent=1 // loop_footer_branch
      %12 = sbr.rel target = $region3
    $region8: #{tpu_custom_call.1} parent=1 // loop_exit
      _
    %1016 = vsyncpa [#allocation3], 1
    %s1017 = scalar_lea.sflag [#allocation3], 1
    %1018 = vsyncpa %s1017, 1

</llo_original>
